<compile_context>
chip_gen: v6e
topology: v6e:2x2x1
jax: 0.10.0
libtpu: 0.0.40
codegen_flags: <defaults>
</compile_context>

<pallas_src>
import jax
import jax.numpy as jnp
from jax.experimental import pallas as pl
from jax.experimental.pallas import tpu as pltpu


def _mlp_kernel(x_ref, w1_ref, b1_ref, w2_ref, b2_ref, w3_ref, b3_ref, o_ref):
    """Fused 3-layer MLP forward: relu(x@W1+b1) -> relu(@W2+b2) -> @W3+b3.

    Matmul inputs are bf16 (native MXU path), accumulation and all
    element-wise math (bias add, ReLU) are f32.
    """
    x = x_ref[...]

    # fc1 + ReLU  (input_dim -> 128)
    h1 = jnp.dot(x, w1_ref[...], preferred_element_type=jnp.float32) + b1_ref[...]
    h1 = jnp.maximum(h1, 0.0)

    # fc2 + ReLU  (128 -> 256)
    h2 = jnp.dot(h1.astype(w2_ref.dtype), w2_ref[...],
                 preferred_element_type=jnp.float32) + b2_ref[...]
    h2 = jnp.maximum(h2, 0.0)

    # fc3 (256 -> output_dim), no activation.  Narrow output stays narrow:
    # the store is masked but writes 32x fewer HBM bytes than a 128-padded one.
    out = jnp.dot(h2.astype(w3_ref.dtype), w3_ref[...],
                  preferred_element_type=jnp.float32) + b3_ref[...]
    o_ref[...] = out.astype(o_ref.dtype)


def _round_up(n, m):
    return ((n + m - 1) // m) * m


def _choose_batch_tile(batch, max_tile):
    """Pick a batch tile: clamp for tiny batches, split for v7x, avoid big pads."""
    b8 = _round_up(batch, 8)
    if b8 <= max_tile:
        if b8 >= 512:
            # Enough work to split into 2 grid steps so both v7x TensorCores
            # get a tile (no effect / harmless on single-TC v5e / v6e).
            return _round_up((b8 + 1) // 2, 8)
        return b8
    # Large batch: prefer a power-of-two tile that divides round_up(B, 8) so
    # the wrapper-side jnp.pad of x is at most 7 rows (not a full tile).
    t = max_tile
    while t >= 128:
        if b8 % t == 0:
            return t
        t //= 2
    return max_tile


def conv_dqn_forward(x, params, *, max_batch_tile=1024, use_bf16=True):
    """Run the ConvDQN forward pass as one fused Pallas kernel, tiled over batch.

    Any batch size is accepted; output has the true (unpadded) output width.
    """
    w1, b1, w2, b2, w3, b3 = params
    B, d_in = x.shape
    d_out = w3.shape[1]
    out_dtype = x.dtype

    # --- dtype policy: bf16 MXU inputs, f32 accumulation / element-wise ------
    if use_bf16:
        mxu_dtype = jnp.bfloat16
        x = x.astype(mxu_dtype)
        w1, w2, w3 = (w.astype(mxu_dtype) for w in (w1, w2, w3))
    b1, b2, b3 = (b.astype(jnp.float32) for b in (b1, b2, b3))

    # --- batch tiling ---------------------------------------------------------
    batch_tile = _choose_batch_tile(B, max_batch_tile)
    n_tiles = pl.cdiv(B, batch_tile)
    B_pad = n_tiles * batch_tile
    if B_pad != B:
        x = jnp.pad(x, ((0, B_pad - B), (0, 0)))

    # Weights / biases are small -> constant index maps keep them resident in
    # VMEM across all grid steps (DMA'd once, never re-fetched).
    full = lambda shape: pl.BlockSpec(shape, lambda i: (0, 0))

    out = pl.pallas_call(
        _mlp_kernel,
        out_shape=jax.ShapeDtypeStruct((B_pad, d_out), out_dtype),
        grid_spec=pltpu.PrefetchScalarGridSpec(
            num_scalar_prefetch=0,
            grid=(n_tiles,),
            in_specs=[
                pl.BlockSpec((batch_tile, d_in), lambda i: (i, 0)),   # x tile
                full(w1.shape), full(b1.shape),
                full(w2.shape), full(b2.shape),
                full(w3.shape), full(b3.shape),
            ],
            out_specs=pl.BlockSpec((batch_tile, d_out), lambda i: (i, 0)),
        ),
        compiler_params=pltpu.CompilerParams(
            dimension_semantics=("parallel",),   # shard batch grid across TCs on v7x
        ),
    )(x, w1, b1, w2, b2, w3, b3)

    # Drop padded batch rows (columns are already the true output width).
    return out[:B] if B_pad != B else out


def init_params(key, input_dim, output_dim, dtype=jnp.float32):
    """Deterministic init mimicking PyTorch nn.Linear (uniform +/- 1/sqrt(fan_in))."""
    def linear(key, fan_in, fan_out):
        kw, kb = jax.random.split(key)
        bound = 1.0 / jnp.sqrt(fan_in)
        w = jax.random.uniform(kw, (fan_in, fan_out), dtype, -bound, bound)
        b = jax.random.uniform(kb, (1, fan_out), dtype, -bound, bound)
        return w, b

    k1, k2, k3 = jax.random.split(key, 3)
    w1, b1 = linear(k1, input_dim, 128)
    w2, b2 = linear(k2, 128, 256)
    w3, b3 = linear(k3, 256, output_dim)
    return (w1, b1, w2, b2, w3, b3)


def reference_forward(x, params):
    """Plain-JAX f32 reference for correctness checking."""
    w1, b1, w2, b2, w3, b3 = params
    h1 = jnp.maximum(x @ w1 + b1, 0.0)
    h2 = jnp.maximum(h1 @ w2 + b2, 0.0)
    return h2 @ w3 + b3


if __name__ == "__main__":
    key = jax.random.PRNGKey(0)
    k_x, k_x2, k_p = jax.random.split(key, 3)

    input_dim = 32
    output_dim = 4
    params = init_params(k_p, input_dim, output_dim)

    # bf16 MXU inputs -> loose tolerance vs. the f32 reference.
    TOL = dict(atol=5e-2, rtol=5e-2)

    # Small batch: single grid step, tile clamped to round_up(8, 8) = 8 rows.
    batch = 8
    x = jax.random.normal(k_x, (batch, input_dim), dtype=jnp.float32)
    out = jax.block_until_ready(conv_dqn_forward(x, params))
    ref = reference_forward(x, params)
    assert out.shape == (batch, output_dim)
    assert jnp.allclose(out, ref, **TOL), "small-batch mismatch vs reference"

    # Larger batch: exercises the multi-tile grid + ragged-batch padding path.
    batch2 = 520
    x2 = jax.random.normal(k_x2, (batch2, input_dim), dtype=jnp.float32)
    out2 = jax.block_until_ready(conv_dqn_forward(x2, params))
    ref2 = reference_forward(x2, params)
    assert out2.shape == (batch2, output_dim)
    assert jnp.allclose(out2, ref2, **TOL), "multi-tile mismatch vs reference"

    print("KERNEL_OK")
</pallas_src>

<mosaic_0001>
module attributes {stable_mosaic.version = 11 : i64} {
  func.func @_mlp_kernel(%arg0: i32, %arg1: memref<8x32xbf16, #tpu.memory_space<vmem>>, %arg2: memref<32x128xbf16, #tpu.memory_space<vmem>>, %arg3: memref<1x128xf32, #tpu.memory_space<vmem>>, %arg4: memref<128x256xbf16, #tpu.memory_space<vmem>>, %arg5: memref<1x256xf32, #tpu.memory_space<vmem>>, %arg6: memref<256x4xbf16, #tpu.memory_space<vmem>>, %arg7: memref<1x4xf32, #tpu.memory_space<vmem>>, %arg8: memref<8x4xf32, #tpu.memory_space<vmem>>) attributes {dimension_semantics = [#tpu.dimension_semantics<parallel>], iteration_bounds = array<i64: 1>, scalar_prefetch = 0 : i64, scratch_operands = 0 : i64, tpu.core_type = #tpu.core_type<tc>, window_params = [{transform_indices = @transform_0, window_bounds = array<i64: 8, 32>}, {pipeline_mode = #tpu.pipeline_mode<synchronous>, transform_indices = @transform_1, window_bounds = array<i64: 32, 128>}, {pipeline_mode = #tpu.pipeline_mode<synchronous>, transform_indices = @transform_2, window_bounds = array<i64: 1, 128>}, {pipeline_mode = #tpu.pipeline_mode<synchronous>, transform_indices = @transform_3, window_bounds = array<i64: 128, 256>}, {pipeline_mode = #tpu.pipeline_mode<synchronous>, transform_indices = @transform_4, window_bounds = array<i64: 1, 256>}, {pipeline_mode = #tpu.pipeline_mode<synchronous>, transform_indices = @transform_5, window_bounds = array<i64: 256, 4>}, {pipeline_mode = #tpu.pipeline_mode<synchronous>, transform_indices = @transform_6, window_bounds = array<i64: 1, 4>}, {transform_indices = @transform_7, window_bounds = array<i64: 8, 4>}]} {
    %c0 = arith.constant 0 : index
    %c0_0 = arith.constant 0 : index
    %0 = vector.load %arg1[%c0, %c0_0] : memref<8x32xbf16, #tpu.memory_space<vmem>>, vector<8x32xbf16>
    %c0_1 = arith.constant 0 : index
    %c0_2 = arith.constant 0 : index
    %1 = vector.load %arg2[%c0_1, %c0_2] : memref<32x128xbf16, #tpu.memory_space<vmem>>, vector<32x128xbf16>
    %cst = arith.constant dense<0.000000e+00> : vector<8x128xf32>
    %2 = tpu.matmul %0, %1, %cst {dimension_numbers = #tpu.dot_dimension_numbers<[1], [0], [0], [1], [0, 0, 1, 1], [], []>} : vector<8x32xbf16>, vector<32x128xbf16>, vector<8x128xf32> -> vector<8x128xf32>
    %c0_3 = arith.constant 0 : index
    %c0_4 = arith.constant 0 : index
    %3 = vector.load %arg3[%c0_3, %c0_4] : memref<1x128xf32, #tpu.memory_space<vmem>>, vector<1x128xf32>
    %4 = vector.broadcast %3 : vector<1x128xf32> to vector<8x128xf32>
    %5 = arith.addf %2, %4 : vector<8x128xf32>
    %cst_5 = arith.constant 0.000000e+00 : f32
    %6 = vector.broadcast %cst_5 : f32 to vector<8x128xf32>
    %7 = arith.maximumf %5, %6 : vector<8x128xf32>
    %8 = arith.truncf %7 : vector<8x128xf32> to vector<8x128xbf16>
    %c0_6 = arith.constant 0 : index
    %c0_7 = arith.constant 0 : index
    %9 = vector.load %arg4[%c0_6, %c0_7] : memref<128x256xbf16, #tpu.memory_space<vmem>>, vector<128x256xbf16>
    %cst_8 = arith.constant dense<0.000000e+00> : vector<8x256xf32>
    %10 = tpu.matmul %8, %9, %cst_8 {dimension_numbers = #tpu.dot_dimension_numbers<[1], [0], [0], [1], [0, 0, 1, 1], [], []>} : vector<8x128xbf16>, vector<128x256xbf16>, vector<8x256xf32> -> vector<8x256xf32>
    %c0_9 = arith.constant 0 : index
    %c0_10 = arith.constant 0 : index
    %11 = vector.load %arg5[%c0_9, %c0_10] : memref<1x256xf32, #tpu.memory_space<vmem>>, vector<1x256xf32>
    %12 = vector.broadcast %11 : vector<1x256xf32> to vector<8x256xf32>
    %13 = arith.addf %10, %12 : vector<8x256xf32>
    %cst_11 = arith.constant 0.000000e+00 : f32
    %14 = vector.broadcast %cst_11 : f32 to vector<8x256xf32>
    %15 = arith.maximumf %13, %14 : vector<8x256xf32>
    %16 = arith.truncf %15 : vector<8x256xf32> to vector<8x256xbf16>
    %c0_12 = arith.constant 0 : index
    %c0_13 = arith.constant 0 : index
    %17 = vector.load %arg6[%c0_12, %c0_13] : memref<256x4xbf16, #tpu.memory_space<vmem>>, vector<256x4xbf16>
    %cst_14 = arith.constant dense<0.000000e+00> : vector<8x4xf32>
    %18 = tpu.matmul %16, %17, %cst_14 {dimension_numbers = #tpu.dot_dimension_numbers<[1], [0], [0], [1], [0, 0, 1, 1], [], []>} : vector<8x256xbf16>, vector<256x4xbf16>, vector<8x4xf32> -> vector<8x4xf32>
    %c0_15 = arith.constant 0 : index
    %c0_16 = arith.constant 0 : index
    %19 = vector.load %arg7[%c0_15, %c0_16] : memref<1x4xf32, #tpu.memory_space<vmem>>, vector<1x4xf32>
    %20 = vector.broadcast %19 : vector<1x4xf32> to vector<8x4xf32>
    %21 = arith.addf %18, %20 : vector<8x4xf32>
    %c0_17 = arith.constant 0 : index
    %c0_18 = arith.constant 0 : index
    %22 = vector.load %arg8[%c0_17, %c0_18] : memref<8x4xf32, #tpu.memory_space<vmem>>, vector<8x4xf32>
    tpu.vector_store %arg8[%c0_17, %c0_18], %21 {strides = array<i32>} : memref<8x4xf32, #tpu.memory_space<vmem>>, vector<8x4xf32>,
    return
  }
  func.func @transform_0(%arg0: i32) -> (i32, i32) {
    %c0_i32 = arith.constant 0 : i32
    %c0_i32_0 = arith.constant 0 : i32
    return %arg0, %c0_i32 : i32, i32
  }
  func.func @transform_1(%arg0: i32) -> (i32, i32) {
    %c0_i32 = arith.constant 0 : i32
    %c0_i32_0 = arith.constant 0 : i32
    %c0_i32_1 = arith.constant 0 : i32
    return %c0_i32, %c0_i32_0 : i32, i32
  }
  func.func @transform_2(%arg0: i32) -> (i32, i32) {
    %c0_i32 = arith.constant 0 : i32
    %c0_i32_0 = arith.constant 0 : i32
    %c0_i32_1 = arith.constant 0 : i32
    return %c0_i32, %c0_i32_0 : i32, i32
  }
  func.func @transform_3(%arg0: i32) -> (i32, i32) {
    %c0_i32 = arith.constant 0 : i32
    %c0_i32_0 = arith.constant 0 : i32
    %c0_i32_1 = arith.constant 0 : i32
    return %c0_i32, %c0_i32_0 : i32, i32
  }
  func.func @transform_4(%arg0: i32) -> (i32, i32) {
    %c0_i32 = arith.constant 0 : i32
    %c0_i32_0 = arith.constant 0 : i32
    %c0_i32_1 = arith.constant 0 : i32
    return %c0_i32, %c0_i32_0 : i32, i32
  }
  func.func @transform_5(%arg0: i32) -> (i32, i32) {
    %c0_i32 = arith.constant 0 : i32
    %c0_i32_0 = arith.constant 0 : i32
    %c0_i32_1 = arith.constant 0 : i32
    return %c0_i32, %c0_i32_0 : i32, i32
  }
  func.func @transform_6(%arg0: i32) -> (i32, i32) {
    %c0_i32 = arith.constant 0 : i32
    %c0_i32_0 = arith.constant 0 : i32
    %c0_i32_1 = arith.constant 0 : i32
    return %c0_i32, %c0_i32_0 : i32, i32
  }
  func.func @transform_7(%arg0: i32) -> (i32, i32) {
    %c0_i32 = arith.constant 0 : i32
    %c0_i32_0 = arith.constant 0 : i32
    return %arg0, %c0_i32 : i32, i32
  }
}

</mosaic_0001>

<llo_original>
// kernel: tpu_custom_call.1
$region0: #{tpu_custom_call.1}
  #allocation0 [shape = 'u32[]', space=smem, size = 0x4, offset = 0x4, fixed_abs, tag = 'smem constant byte address 0x4 - core index']
  #allocation1 [shape = 'u32[144,128]{1,0:T(1,128)}', space=vmem, size = 0x12000, scoped, tag = 'internal scratch']
  %s0 = inlined_call_operand.vmem [shape: bf16[8,32], index: 0, kind: input, shape index: {}]
  %s1 = inlined_call_operand.hbm [shape: bf16[32,128], index: 1, kind: input, shape index: {}]
  %s2 = inlined_call_operand.vmem [shape: f32[1,128], index: 2, kind: input, shape index: {}]
  %s3 = inlined_call_operand.vmem [shape: bf16[128,256], index: 3, kind: input, shape index: {}]
  %s4 = inlined_call_operand.vmem [shape: f32[1,256], index: 4, kind: input, shape index: {}]
  %s5 = inlined_call_operand.vmem [shape: bf16[256,4], index: 5, kind: input, shape index: {}]
  %s6 = inlined_call_operand.vmem [shape: f32[1,4], index: 6, kind: input, shape index: {}]
  %s7 = inlined_call_operand.vmem [shape: f32[8,4], index: 7, kind: output, shape index: {}]
  %s8 = sld [smem:[#allocation0]]
  $region42: #{tpu_custom_call.1} parent=0
    _
  %s10 = ssub.s32 1, %s8
  %s11 = scalar_select 0, %s10, %s8
  $region1: #{tpu_custom_call.1} parent=0
    #allocation2 [shape = 'u8[8192]{0}', space=vmem, size = 0x2000, scoped, tag = 'input window, operand 1, single buffered']
    #allocation3 [shape = 's32[1]{0}', space=sflag, size = 0x4, scoped, tag = 'scoped memory for tpu_custom_call.1']
    %12 = vsyncpa [#allocation3], 0
    // Predicated region
    $region2: #{tpu_custom_call.1} parent=1 // pred_check
      _
    $region3: #{tpu_custom_call.1} parent=1 // pred_check_branch
      %14 = sbr.rel (0) target = $region5
    $region4: #{tpu_custom_call.1} parent=1 // pred_region
      _
    $region5: #{tpu_custom_call.1} parent=1 // pred_fallthru
      _
    // Predicated region
    $region6: #{tpu_custom_call.1} parent=1 // pred_check
      _
    $region7: #{tpu_custom_call.1} parent=1 // pred_check_branch
      %16 = sbr.rel (0) target = $region9
    $region8: #{tpu_custom_call.1} parent=1 // pred_region
      %s18 = ssub.s32 256, 256
      %19 = vsyncadd [#allocation3], %s18
      %s20 = sshll.u32 [#allocation2], 4
      %s21 = int_to_ptr.vmem [resolvable:$true] %s20
      %26 = dma.hbm_to_vmem [thread:$0]  %s1, 256, %s21, [#allocation3], 64, 64, 4
    $region9: #{tpu_custom_call.1} parent=1 // pred_fallthru
      _
    // Predicated region
    $region10: #{tpu_custom_call.1} parent=1 // pred_check
      _
    $region11: #{tpu_custom_call.1} parent=1 // pred_check_branch
      %28 = sbr.rel (0) target = $region13
    $region12: #{tpu_custom_call.1} parent=1 // pred_region
      _
    $region13: #{tpu_custom_call.1} parent=1 // pred_fallthru
      _
    // Predicated region
    $region14: #{tpu_custom_call.1} parent=1 // pred_check
      _
    $region15: #{tpu_custom_call.1} parent=1 // pred_check_branch
      %30 = sbr.rel (0) target = $region17
    $region16: #{tpu_custom_call.1} parent=1 // pred_region
      _
    $region17: #{tpu_custom_call.1} parent=1 // pred_fallthru
      _
    // Predicated region
    $region18: #{tpu_custom_call.1} parent=1 // pred_check
      _
    $region19: #{tpu_custom_call.1} parent=1 // pred_check_branch
      %32 = sbr.rel (0) target = $region21
    $region20: #{tpu_custom_call.1} parent=1 // pred_region
      _
    $region21: #{tpu_custom_call.1} parent=1 // pred_fallthru
      _
    // Predicated region
    $region22: #{tpu_custom_call.1} parent=1 // pred_check
      _
    $region23: #{tpu_custom_call.1} parent=1 // pred_check_branch
      %34 = sbr.rel (0) target = $region25
    $region24: #{tpu_custom_call.1} parent=1 // pred_region
      _
    $region25: #{tpu_custom_call.1} parent=1 // pred_fallthru
      _
    // Predicated region
    $region26: #{tpu_custom_call.1} parent=1 // pred_check
      _
    $region27: #{tpu_custom_call.1} parent=1 // pred_check_branch
      %36 = sbr.rel (0) target = $region29
    $region28: #{tpu_custom_call.1} parent=1 // pred_region
      _
    $region29: #{tpu_custom_call.1} parent=1 // pred_fallthru
      _
    // Predicated region
    $region30: #{tpu_custom_call.1} parent=1 // pred_check
      _
    $region31: #{tpu_custom_call.1} parent=1 // pred_check_branch
      %38 = sbr.rel (0) target = $region33
    $region32: #{tpu_custom_call.1} parent=1 // pred_region
      %39 = dma.done [#allocation3], 256
    $region33: #{tpu_custom_call.1} parent=1 // pred_fallthru
      _
    %v41 = vld [vmem:[%s0] sm:$0xf]
    %v42 = vld [vmem:[#allocation2] sm:$0xf]
    %v43 = vld [vmem:[#allocation2 + $0x4] sm:$0xf]
    %v44 = vld [vmem:[#allocation2 + $0x8] sm:$0xf]
    %v45 = vld [vmem:[#allocation2 + $0xc] sm:$0xf]
    %v46 = vld [vmem:[%s2] sm:$0x1]
    %v48 = vlaneseq
    %v49 = vshrl.u32 %v48, 7
    %v50 = vsub.s32 0, %v49
    %v51 = vrot.slane %v46, %v50
    %v57 = vunpack.c.l.b16 %v42
    %v58 = vunpack.c.l.b16 %v43
    %v59 = vunpack.c.l.b16 %v44
    %v60 = vunpack.c.l.b16 %v45
    %v61 = vpack.c.b16 %v58, %v57
    %v62 = vpack.c.b16 %v60, %v59
    %vm65 = vcmask 261120
    %v67 = vsel %vm65, %v41, 0
    %69 = vmatprep.subr.bf16.mxu0 0
    %70 = vmatpush1.bf16.msra.mxu0 0
    %71 = vmatprep.subr.bf16.mxu0 0
    %72 = vmatpush1.bf16.msra.mxu0 0
    %73 = vmatprep.subr.bf16.mxu0 0
    %74 = vmatpush1.bf16.msra.mxu0 0
    %75 = vmatprep.subr.bf16.mxu0 0
    %76 = vmatpush1.bf16.msra.mxu0 0
    %77 = vmatprep.subr.bf16.mxu0 0
    %78 = vmatpush1.bf16.msra.mxu0 0
    %79 = vmatprep.subr.bf16.mxu0 0
    %80 = vmatpush1.bf16.msra.mxu0 0
    %81 = vmatprep.subr.bf16.mxu0 0
    %82 = vmatpush1.bf16.msra.mxu0 %v62
    %83 = vmatprep.subr.bf16.mxu0 0
    %84 = vmatpush1.bf16.msra.mxu0 %v61
    %85 = vmatprep.subr.bf16.mxu0 0
    %86 = vmatpush2.bf16.msra.mxu0 0
    %87 = vmatprep.subr.bf16.mxu0 0
    %88 = vmatpush2.bf16.msra.mxu0 0
    %89 = vmatprep.subr.bf16.mxu0 0
    %90 = vmatpush2.bf16.msra.mxu0 0
    %91 = vmatprep.subr.bf16.mxu0 0
    %92 = vmatpush2.bf16.msra.mxu0 0
    %93 = vmatprep.subr.bf16.mxu0 0
    %94 = vmatpush2.bf16.msra.mxu0 0
    %95 = vmatprep.subr.bf16.mxu0 0
    %96 = vmatpush2.bf16.msra.mxu0 0
    %97 = vmatprep.subr.bf16.mxu0 0
    %98 = vmatpush2.bf16.msra.mxu0 0
    %99 = vmatprep.subr.bf16.mxu0 0
    %100 = vmatpush2.bf16.msra.mxu0 0
    %101 = vmatprep.mubr.bf16.mxu0 0
    %102 = vmatmul.mubr.bf16.gmra.mxu0 %v67
    %v103 = vpop.f32.mrf.mxu0
    %v104 = vadd.f32 %v51, %v103
    %v105 = vpop.f32.mrf.mxu0
    %v106 = vpop.f32.mrf.mxu0
    %v107 = vpop.f32.mrf.mxu0
    %108 = vdwg.mxu0
    %v109 = vmax.f32 %v104, 0.0
    %v110 = vpack.c.bf16 %v109, %v109
    %v111 = vld [vmem:[%s3] sm:$0xff]
    %v112 = vld [vmem:[%s3 + $0x8] sm:$0xff]
    %v113 = vld [vmem:[%s3 + $0x10] sm:$0xff]
    %v114 = vld [vmem:[%s3 + $0x18] sm:$0xff]
    %v115 = vld [vmem:[%s3 + $0x20] sm:$0xff]
    %v116 = vld [vmem:[%s3 + $0x28] sm:$0xff]
    %v117 = vld [vmem:[%s3 + $0x30] sm:$0xff]
    %v118 = vld [vmem:[%s3 + $0x38] sm:$0xff]
    %v119 = vld [vmem:[%s3 + $0x40] sm:$0xff]
    %v120 = vld [vmem:[%s3 + $0x48] sm:$0xff]
    %v121 = vld [vmem:[%s3 + $0x50] sm:$0xff]
    %v122 = vld [vmem:[%s3 + $0x58] sm:$0xff]
    %v123 = vld [vmem:[%s3 + $0x60] sm:$0xff]
    %v124 = vld [vmem:[%s3 + $0x68] sm:$0xff]
    %v125 = vld [vmem:[%s3 + $0x70] sm:$0xff]
    %v126 = vld [vmem:[%s3 + $0x78] sm:$0xff]
    %v127 = vld [vmem:[%s4] sm:$0x3]
    %v129 = vlaneseq
    %v130 = vshrl.u32 %v129, 7
    %v131 = vsub.s32 0, %v130
    %v132 = vrot.slane %v127, %v131
    %v133 = vlaneseq
    %v134 = vshrl.u32 %v133, 7
    %v135 = vsub.s32 1, %v134
    %v136 = vrot.slane %v127, %v135
    %v155 = vunpack.c.l.b16 %v111
    %v156 = vunpack.c.h.b16 %v111
    %v157 = vunpack.c.l.b16 %v112
    %v158 = vunpack.c.h.b16 %v112
    %v159 = vunpack.c.l.b16 %v113
    %v160 = vunpack.c.h.b16 %v113
    %v161 = vunpack.c.l.b16 %v114
    %v162 = vunpack.c.h.b16 %v114
    %v163 = vunpack.c.l.b16 %v115
    %v164 = vunpack.c.h.b16 %v115
    %v165 = vunpack.c.l.b16 %v116
    %v166 = vunpack.c.h.b16 %v116
    %v167 = vunpack.c.l.b16 %v117
    %v168 = vunpack.c.h.b16 %v117
    %v169 = vunpack.c.l.b16 %v118
    %v170 = vunpack.c.h.b16 %v118
    %v171 = vunpack.c.l.b16 %v119
    %v172 = vunpack.c.h.b16 %v119
    %v173 = vunpack.c.l.b16 %v120
    %v174 = vunpack.c.h.b16 %v120
    %v175 = vunpack.c.l.b16 %v121
    %v176 = vunpack.c.h.b16 %v121
    %v177 = vunpack.c.l.b16 %v122
    %v178 = vunpack.c.h.b16 %v122
    %v179 = vunpack.c.l.b16 %v123
    %v180 = vunpack.c.h.b16 %v123
    %v181 = vunpack.c.l.b16 %v124
    %v182 = vunpack.c.h.b16 %v124
    %v183 = vunpack.c.l.b16 %v125
    %v184 = vunpack.c.h.b16 %v125
    %v185 = vunpack.c.l.b16 %v126
    %v186 = vunpack.c.h.b16 %v126
    %v187 = vpack.c.b16 %v157, %v155
    %v188 = vpack.c.b16 %v158, %v156
    %v189 = vpack.c.b16 %v161, %v159
    %v190 = vpack.c.b16 %v162, %v160
    %v191 = vpack.c.b16 %v165, %v163
    %v192 = vpack.c.b16 %v166, %v164
    %v193 = vpack.c.b16 %v169, %v167
    %v194 = vpack.c.b16 %v170, %v168
    %v195 = vpack.c.b16 %v173, %v171
    %v196 = vpack.c.b16 %v174, %v172
    %v197 = vpack.c.b16 %v177, %v175
    %v198 = vpack.c.b16 %v178, %v176
    %v199 = vpack.c.b16 %v181, %v179
    %v200 = vpack.c.b16 %v182, %v180
    %v201 = vpack.c.b16 %v185, %v183
    %v202 = vpack.c.b16 %v186, %v184
    %219 = vmatprep.subr.bf16.mxu0 %v202
    %220 = vmatpush1.bf16.msra.mxu0 %v201
    %221 = vmatprep.subr.bf16.mxu0 %v200
    %222 = vmatpush1.bf16.msra.mxu0 %v199
    %223 = vmatprep.subr.bf16.mxu0 %v198
    %224 = vmatpush1.bf16.msra.mxu0 %v197
    %225 = vmatprep.subr.bf16.mxu0 %v196
    %226 = vmatpush1.bf16.msra.mxu0 %v195
    %227 = vmatprep.subr.bf16.mxu0 %v194
    %228 = vmatpush1.bf16.msra.mxu0 %v193
    %229 = vmatprep.subr.bf16.mxu0 %v192
    %230 = vmatpush1.bf16.msra.mxu0 %v191
    %231 = vmatprep.subr.bf16.mxu0 %v190
    %232 = vmatpush1.bf16.msra.mxu0 %v189
    %233 = vmatprep.subr.bf16.mxu0 %v188
    %234 = vmatpush1.bf16.msra.mxu0 %v187
    %235 = vmatprep.subr.bf16.mxu0 0
    %236 = vmatpush2.bf16.msra.mxu0 0
    %237 = vmatprep.subr.bf16.mxu0 0
    %238 = vmatpush2.bf16.msra.mxu0 0
    %239 = vmatprep.subr.bf16.mxu0 0
    %240 = vmatpush2.bf16.msra.mxu0 0
    %241 = vmatprep.subr.bf16.mxu0 0
    %242 = vmatpush2.bf16.msra.mxu0 0
    %243 = vmatprep.subr.bf16.mxu0 0
    %244 = vmatpush2.bf16.msra.mxu0 0
    %245 = vmatprep.subr.bf16.mxu0 0
    %246 = vmatpush2.bf16.msra.mxu0 0
    %247 = vmatprep.subr.bf16.mxu0 0
    %248 = vmatpush2.bf16.msra.mxu0 0
    %249 = vmatprep.subr.bf16.mxu0 0
    %250 = vmatpush2.bf16.msra.mxu0 0
    %251 = vmatprep.mubr.bf16.mxu0 0
    %252 = vmatmul.mubr.bf16.gmra.mxu0 %v110
    %v253 = vpop.f32.mrf.mxu0
    %v254 = vadd.f32 %v132, %v253
    %v255 = vpop.f32.mrf.mxu0
    %v256 = vadd.f32 %v136, %v255
    %v257 = vpop.f32.mrf.mxu0
    %v258 = vpop.f32.mrf.mxu0
    %259 = vdwg.mxu0
    %v260 = vmax.f32 %v254, 0.0
    %v261 = vmax.f32 %v256, 0.0
    %v262 = vpack.c.bf16 %v260, %v260
    %v263 = vpack.c.bf16 %v261, %v261
    %v264 = vld [vmem:[%s5] sm:$0xf]
    %v265 = vld [vmem:[%s5 + $0x4] sm:$0xf]
    %v266 = vld [vmem:[%s5 + $0x8] sm:$0xf]
    %v267 = vld [vmem:[%s5 + $0xc] sm:$0xf]
    %v268 = vld [vmem:[%s5 + $0x10] sm:$0xf]
    %v269 = vld [vmem:[%s5 + $0x14] sm:$0xf]
    %v270 = vld [vmem:[%s5 + $0x18] sm:$0xf]
    %v271 = vld [vmem:[%s5 + $0x1c] sm:$0xf]
    %v272 = vld [vmem:[%s5 + $0x20] sm:$0xf]
    %v273 = vld [vmem:[%s5 + $0x24] sm:$0xf]
    %v274 = vld [vmem:[%s5 + $0x28] sm:$0xf]
    %v275 = vld [vmem:[%s5 + $0x2c] sm:$0xf]
    %v276 = vld [vmem:[%s5 + $0x30] sm:$0xf]
    %v277 = vld [vmem:[%s5 + $0x34] sm:$0xf]
    %v278 = vld [vmem:[%s5 + $0x38] sm:$0xf]
    %v279 = vld [vmem:[%s5 + $0x3c] sm:$0xf]
    %v280 = vld [vmem:[%s5 + $0x40] sm:$0xf]
    %v281 = vld [vmem:[%s5 + $0x44] sm:$0xf]
    %v282 = vld [vmem:[%s5 + $0x48] sm:$0xf]
    %v283 = vld [vmem:[%s5 + $0x4c] sm:$0xf]
    %v284 = vld [vmem:[%s5 + $0x50] sm:$0xf]
    %v285 = vld [vmem:[%s5 + $0x54] sm:$0xf]
    %v286 = vld [vmem:[%s5 + $0x58] sm:$0xf]
    %v287 = vld [vmem:[%s5 + $0x5c] sm:$0xf]
    %v288 = vld [vmem:[%s5 + $0x60] sm:$0xf]
    %v289 = vld [vmem:[%s5 + $0x64] sm:$0xf]
    %v290 = vld [vmem:[%s5 + $0x68] sm:$0xf]
    %v291 = vld [vmem:[%s5 + $0x6c] sm:$0xf]
    %v292 = vld [vmem:[%s5 + $0x70] sm:$0xf]
    %v293 = vld [vmem:[%s5 + $0x74] sm:$0xf]
    %v294 = vld [vmem:[%s5 + $0x78] sm:$0xf]
    %v295 = vld [vmem:[%s5 + $0x7c] sm:$0xf]
    %v296 = vld [vmem:[%s6] sm:$0x1]
    %v298 = vlaneseq
    %v299 = vshrl.u32 %v298, 7
    %v300 = vsub.s32 0, %v299
    %v301 = vrot.slane %v296, %v300
    %v335 = vunpack.c.l.b16 %v264
    %v336 = vunpack.c.l.b16 %v265
    %v337 = vunpack.c.l.b16 %v266
    %v338 = vunpack.c.l.b16 %v267
    %v339 = vunpack.c.l.b16 %v268
    %v340 = vunpack.c.l.b16 %v269
    %v341 = vunpack.c.l.b16 %v270
    %v342 = vunpack.c.l.b16 %v271
    %v343 = vunpack.c.l.b16 %v272
    %v344 = vunpack.c.l.b16 %v273
    %v345 = vunpack.c.l.b16 %v274
    %v346 = vunpack.c.l.b16 %v275
    %v347 = vunpack.c.l.b16 %v276
    %v348 = vunpack.c.l.b16 %v277
    %v349 = vunpack.c.l.b16 %v278
    %v350 = vunpack.c.l.b16 %v279
    %v351 = vunpack.c.l.b16 %v280
    %v352 = vunpack.c.l.b16 %v281
    %v353 = vunpack.c.l.b16 %v282
    %v354 = vunpack.c.l.b16 %v283
    %v355 = vunpack.c.l.b16 %v284
    %v356 = vunpack.c.l.b16 %v285
    %v357 = vunpack.c.l.b16 %v286
    %v358 = vunpack.c.l.b16 %v287
    %v359 = vunpack.c.l.b16 %v288
    %v360 = vunpack.c.l.b16 %v289
    %v361 = vunpack.c.l.b16 %v290
    %v362 = vunpack.c.l.b16 %v291
    %v363 = vunpack.c.l.b16 %v292
    %v364 = vunpack.c.l.b16 %v293
    %v365 = vunpack.c.l.b16 %v294
    %v366 = vunpack.c.l.b16 %v295
    %v367 = vpack.c.b16 %v336, %v335
    %v368 = vpack.c.b16 %v338, %v337
    %v369 = vpack.c.b16 %v340, %v339
    %v370 = vpack.c.b16 %v342, %v341
    %v371 = vpack.c.b16 %v344, %v343
    %v372 = vpack.c.b16 %v346, %v345
    %v373 = vpack.c.b16 %v348, %v347
    %v374 = vpack.c.b16 %v350, %v349
    %v375 = vpack.c.b16 %v352, %v351
    %v376 = vpack.c.b16 %v354, %v353
    %v377 = vpack.c.b16 %v356, %v355
    %v378 = vpack.c.b16 %v358, %v357
    %v379 = vpack.c.b16 %v360, %v359
    %v380 = vpack.c.b16 %v362, %v361
    %v381 = vpack.c.b16 %v364, %v363
    %v382 = vpack.c.b16 %v366, %v365
    %399 = vmatprep.subr.bf16.mxu0 0
    %400 = vmatpush1.bf16.msra.mxu0 %v374
    %401 = vmatprep.subr.bf16.mxu0 0
    %402 = vmatpush1.bf16.msra.mxu0 %v373
    %403 = vmatprep.subr.bf16.mxu0 0
    %404 = vmatpush1.bf16.msra.mxu0 %v372
    %405 = vmatprep.subr.bf16.mxu0 0
    %406 = vmatpush1.bf16.msra.mxu0 %v371
    %407 = vmatprep.subr.bf16.mxu0 0
    %408 = vmatpush1.bf16.msra.mxu0 %v370
    %409 = vmatprep.subr.bf16.mxu0 0
    %410 = vmatpush1.bf16.msra.mxu0 %v369
    %411 = vmatprep.subr.bf16.mxu0 0
    %412 = vmatpush1.bf16.msra.mxu0 %v368
    %413 = vmatprep.subr.bf16.mxu0 0
    %414 = vmatpush1.bf16.msra.mxu0 %v367
    %415 = vmatprep.subr.bf16.mxu0 0
    %416 = vmatpush2.bf16.msra.mxu0 %v382
    %417 = vmatprep.subr.bf16.mxu0 0
    %418 = vmatpush2.bf16.msra.mxu0 %v381
    %419 = vmatprep.subr.bf16.mxu0 0
    %420 = vmatpush2.bf16.msra.mxu0 %v380
    %421 = vmatprep.subr.bf16.mxu0 0
    %422 = vmatpush2.bf16.msra.mxu0 %v379
    %423 = vmatprep.subr.bf16.mxu0 0
    %424 = vmatpush2.bf16.msra.mxu0 %v378
    %425 = vmatprep.subr.bf16.mxu0 0
    %426 = vmatpush2.bf16.msra.mxu0 %v377
    %427 = vmatprep.subr.bf16.mxu0 0
    %428 = vmatpush2.bf16.msra.mxu0 %v376
    %429 = vmatprep.subr.bf16.mxu0 0
    %430 = vmatpush2.bf16.msra.mxu0 %v375
    %431 = vmatprep.mubr.bf16.mxu0 %v263
    %432 = vmatmul.mubr.bf16.gmra.mxu0 %v262
    %v433 = vpop.f32.mrf.mxu0
    %v434 = vadd.f32 %v301, %v433
    %v435 = vpop.f32.mrf.mxu0
    %v436 = vpop.f32.mrf.mxu0
    %v437 = vpop.f32.mrf.mxu0
    %438 = vdwg.mxu0
    %vm439 = vcmask 31744
    %440 = vst.msk [vmem:[%s7] sm:$0xff] %vm439, %v434
    // Predicated region
    $region34: #{tpu_custom_call.1} parent=1 // pred_check
      _
    $region35: #{tpu_custom_call.1} parent=1 // pred_check_branch
      %442 = sbr.rel (0) target = $region37
    $region36: #{tpu_custom_call.1} parent=1 // pred_region
      _
    $region37: #{tpu_custom_call.1} parent=1 // pred_fallthru
      _
    // Predicated region
    $region38: #{tpu_custom_call.1} parent=1 // pred_check
      _
    $region39: #{tpu_custom_call.1} parent=1 // pred_check_branch
      %444 = sbr.rel (0) target = $region41
    $region40: #{tpu_custom_call.1} parent=1 // pred_region
      _
    $region41: #{tpu_custom_call.1} parent=1 // pred_fallthru
      _
    %445 = vsyncpa [#allocation3], 1

</llo_original>
